<compile_context>
chip_gen: v7x
topology: tpu7x:2x2x1
jax: 0.10.0
libtpu: 0.0.40
codegen_flags: <defaults>
</compile_context>

<pallas_src>
import jax
import jax.numpy as jnp
from jax.experimental import pallas as pl
from jax.experimental.pallas import tpu as pltpu

_LANES = (2048, 1024, 512, 256, 128)  # candidate lane widths, widest first
_TARGET_TILE_BYTES = 4 << 20          # ~4 MiB per tile buffer
_DEFAULT_VMEM_LIMIT = 32 << 20        # explicit scoped-VMEM budget (all gens)


def _copy_kernel(x_ref, o_ref):
    # Pure lane-dense VMEM tile copy; all "work" in Squeeze is data movement.
    o_ref[...] = x_ref[...]


def _sublane_pack(dtype) -> int:
    """Native packed-sublane count: 8 for f32, 16 for bf16/f16, 32 for 8-bit."""
    itemsize = jnp.dtype(dtype).itemsize
    return 8 * max(1, 4 // max(1, itemsize))


def _vmem_limit_bytes() -> int:
    """Explicit scoped-VMEM budget, capped by the chip's physical VMEM."""
    limit = _DEFAULT_VMEM_LIMIT
    try:
        cap = pltpu.get_tpu_info().vmem_capacity_bytes
        limit = min(limit, cap // 2)  # v7x: 64 MiB physical -> 32 MiB budget
    except Exception:
        pass
    return max(limit, 8 << 20)


def _grid_semantics():
    """CORE_PARALLEL only when we can confirm >=2 TensorCores (v7x)."""
    try:
        info = pltpu.get_tpu_info()
        cores = None
        for attr in ("num_cores", "tensorcores_per_chip", "num_tensorcores",
                     "core_count"):
            val = getattr(info, attr, None)
            if isinstance(val, int) and val > 0:
                cores = val
                break
        if cores is not None and cores >= 2:
            return (pltpu.CORE_PARALLEL,)
    except Exception:
        pass
    return ("parallel",)


def _choose_slab(n: int, dtype):
    """Pick (rows, lane): n == rows*lane, lane % 128 == 0, rows % pack == 0."""
    pack = _sublane_pack(dtype)
    for lane in _LANES:
        if n % (pack * lane) == 0:
            return n // lane, lane
    return None


def _pick_tile_rows(rows: int, lane: int, dtype) -> int:
    """Largest multiple-of-pack divisor of `rows` with tile bytes <= ~4 MiB."""
    pack = _sublane_pack(dtype)
    itemsize = jnp.dtype(dtype).itemsize
    cap = max(pack, min(rows, _TARGET_TILE_BYTES // (lane * itemsize)))
    cap = max((cap // pack) * pack, pack)
    t = cap
    while t >= pack:
        if rows % t == 0:
            return t
        t -= pack
    return pack  # rows is a multiple of pack by construction


def _lane_dense_copy(flat: jax.Array) -> jax.Array:
    """Tiled, lane-dense, double-buffered Pallas copy of a 1-D array."""
    n = flat.size
    itemsize = jnp.dtype(flat.dtype).itemsize
    rows, lane = _choose_slab(n, flat.dtype)
    tile_rows = _pick_tile_rows(rows, lane, flat.dtype)
    grid = (rows // tile_rows,)

    x2d = flat.reshape(rows, lane)  # free metadata reshape outside the kernel
    out2d = pl.pallas_call(
        _copy_kernel,
        grid=grid,
        in_specs=[pl.BlockSpec((tile_rows, lane), lambda i: (i, 0))],
        out_specs=pl.BlockSpec((tile_rows, lane), lambda i: (i, 0)),
        out_shape=jax.ShapeDtypeStruct((rows, lane), flat.dtype),
        compiler_params=pltpu.CompilerParams(
            dimension_semantics=_grid_semantics(),
            vmem_limit_bytes=_vmem_limit_bytes(),
        ),
        cost_estimate=pl.CostEstimate(
            flops=0,
            transcendentals=0,
            bytes_accessed=2 * n * itemsize,
        ),
    )(x2d)
    return out2d.reshape(n)


def squeeze_pallas(x: jax.Array, dim: int = -1,
                   materialize_with_pallas: bool = False) -> jax.Array:
    """Pallas-backed equivalent of torch.Tensor.squeeze(dim=dim).

    Default path is the free metadata reshape (zero HBM traffic). Set
    materialize_with_pallas=True only when a freshly materialized buffer is
    explicitly required; that path uses the lane-dense tiled copy kernel.
    """
    if x.ndim == 0:
        return x
    axis = dim if dim >= 0 else x.ndim + dim
    if x.shape[axis] != 1:
        # PyTorch semantics: squeeze on a non-singleton dim is a no-op.
        return x

    out_shape = x.shape[:axis] + x.shape[axis + 1:]
    # The actual squeeze: a free metadata reshape (no HBM traffic).
    y = x.reshape(out_shape)

    if not materialize_with_pallas:
        return y
    n = y.size
    if y.ndim == 0 or n == 0 or _choose_slab(n, y.dtype) is None:
        # No lane-dense slab possible at this size; the reshape above already
        # did all the work — a kernel would only add HBM traffic.
        return y

    return _lane_dense_copy(y.reshape(-1)).reshape(out_shape)


class Squeeze:
    """Mirror of the PyTorch module (no parameters)."""

    def __init__(self, dim: int = -1):
        self.dim = dim

    def __call__(self, x: jax.Array) -> jax.Array:
        # Production path: free reshape, no kernel launch.
        return squeeze_pallas(x, dim=self.dim, materialize_with_pallas=False)


if __name__ == "__main__":
    key = jax.random.PRNGKey(0)

    # Value-head style activation [batch, hidden, 1].
    batch, hidden = 8, 128
    x = jax.random.normal(key, (batch, hidden, 1), dtype=jnp.float32)

    module = Squeeze(dim=-1)

    # 1) Default / production path: free metadata reshape, no kernel.
    y = jax.block_until_ready(module(x))
    expected = jnp.squeeze(x, axis=-1)
    assert y.shape == (batch, hidden), y.shape
    assert y.dtype == x.dtype
    assert bool(jnp.array_equal(y, expected))

    # 2) Explicit opt-in materialization: exercises the lane-dense Pallas copy.
    y_mat = jax.block_until_ready(
        squeeze_pallas(x, dim=-1, materialize_with_pallas=True))
    assert y_mat.shape == (batch, hidden)
    assert bool(jnp.array_equal(y_mat, expected))

    # 3) bf16 opt-in path (dtype-aware sublane packing: 16-row alignment).
    x_bf16 = jax.random.normal(
        jax.random.PRNGKey(3), (16, 128, 1)).astype(jnp.bfloat16)
    y_bf16 = jax.block_until_ready(
        squeeze_pallas(x_bf16, dim=-1, materialize_with_pallas=True))
    assert y_bf16.shape == (16, 128)
    assert bool(jnp.array_equal(y_bf16, jnp.squeeze(x_bf16, axis=-1)))

    # 4) Small / non-slab-able shape -> pure-reshape fallback (by design).
    x_small = jax.random.normal(jax.random.PRNGKey(1), (2, 32, 1), jnp.float32)
    y_small = jax.block_until_ready(
        squeeze_pallas(x_small, dim=-1, materialize_with_pallas=True))
    assert y_small.shape == (2, 32)
    assert bool(jnp.array_equal(y_small, jnp.squeeze(x_small, axis=-1)))

    # 5) PyTorch no-op semantics on a non-singleton trailing dim.
    x_noop = jax.random.normal(jax.random.PRNGKey(2), (2, 32, 3), jnp.float32)
    y_noop = jax.block_until_ready(module(x_noop))
    assert y_noop.shape == (2, 32, 3)
    assert bool(jnp.array_equal(y_noop, x_noop))

    print("KERNEL_OK")
</pallas_src>

<mosaic_0001>
module attributes {stable_mosaic.version = 11 : i64} {
  func.func @_copy_kernel(%arg0: i32, %arg1: memref<8x128xf32, #tpu.memory_space<vmem>>, %arg2: memref<8x128xf32, #tpu.memory_space<vmem>>) attributes {dimension_semantics = [#tpu.dimension_semantics<parallel>], iteration_bounds = array<i64: 1>, scalar_prefetch = 0 : i64, scratch_operands = 0 : i64, tpu.core_type = #tpu.core_type<tc>, window_params = [{transform_indices = @transform_0, window_bounds = array<i64: 8, 128>}, {transform_indices = @transform_1, window_bounds = array<i64: 8, 128>}]} {
    %c0 = arith.constant 0 : index
    %c0_0 = arith.constant 0 : index
    %0 = vector.load %arg1[%c0, %c0_0] : memref<8x128xf32, #tpu.memory_space<vmem>>, vector<8x128xf32>
    %c0_1 = arith.constant 0 : index
    %c0_2 = arith.constant 0 : index
    %1 = vector.load %arg2[%c0_1, %c0_2] : memref<8x128xf32, #tpu.memory_space<vmem>>, vector<8x128xf32>
    tpu.vector_store %arg2[%c0_1, %c0_2], %0 {strides = array<i32>} : memref<8x128xf32, #tpu.memory_space<vmem>>, vector<8x128xf32>,
    return
  }
  func.func @transform_0(%arg0: i32) -> (i32, i32) {
    %c0_i32 = arith.constant 0 : i32
    %c0_i32_0 = arith.constant 0 : i32
    return %arg0, %c0_i32 : i32, i32
  }
  func.func @transform_1(%arg0: i32) -> (i32, i32) {
    %c0_i32 = arith.constant 0 : i32
    %c0_i32_0 = arith.constant 0 : i32
    return %arg0, %c0_i32 : i32, i32
  }
}

</mosaic_0001>

<llo_original>
// kernel: tpu_custom_call.1
$region0: #{tpu_custom_call.1}
  #allocation0 [shape = 'u32[]', space=smem, size = 0x4, offset = 0x4, fixed_abs, tag = 'smem constant byte address 0x4 - core index']
  #allocation1 [shape = 'u32[144,128]{1,0:T(1,128)}', space=vmem, size = 0x12000, scoped, tag = 'internal scratch']
  %s0 = inlined_call_operand.hbm [shape: f32[8,128], index: 0, kind: input, shape index: {}]
  %s1 = inlined_call_operand.hbm [shape: f32[8,128], index: 1, kind: output, shape index: {}]
  %s2 = sld [smem:[#allocation0]]
  $region18: #{tpu_custom_call.1} parent=0
    _
  %s4 = ssub.s32 1, %s2
  %s5 = scalar_select 0, %s4, %s2
  $region1: #{tpu_custom_call.1} parent=0
    #allocation2 [shape = 'u8[4096]{0}', space=vmem, size = 0x1000, scoped, tag = 'input window, operand 0, single buffered']
    #allocation3 [shape = 's32[1]{0}', space=sflag, size = 0x4, scoped, tag = 'scoped memory for tpu_custom_call.1']
    #allocation4 [shape = 's32[1]{0}', space=sflag, size = 0x4, scoped, tag = 'scoped memory for tpu_custom_call.1']
    #allocation5 [shape = 'u8[4096]{0}', space=vmem, size = 0x1000, scoped, tag = 'output window, operand 0, single buffered']
    %6 = vsyncpa [#allocation3], 0
    %7 = vsyncpa [#allocation4], 0
    // Predicated region
    $region2: #{tpu_custom_call.1} parent=1 // pred_check
      _
    $region3: #{tpu_custom_call.1} parent=1 // pred_check_branch
      %9 = sbr.rel (0) target = $region5
    $region4: #{tpu_custom_call.1} parent=1 // pred_region
      %s11 = ssub.s32 128, 128
      %12 = vsyncadd [#allocation3], %s11
      %s14 = sshll.u32 [#allocation2], 4
      %s15 = int_to_ptr.vmem [resolvable:$true] %s14
      %17 = dma.hbm_to_vmem [thread:$0]  %s0, 128, %s15, [#allocation3]
    $region5: #{tpu_custom_call.1} parent=1 // pred_fallthru
      _
    // Predicated region
    $region6: #{tpu_custom_call.1} parent=1 // pred_check
      _
    $region7: #{tpu_custom_call.1} parent=1 // pred_check_branch
      %19 = sbr.rel (0) target = $region9
    $region8: #{tpu_custom_call.1} parent=1 // pred_region
      %20 = dma.done [#allocation3], 128
    $region9: #{tpu_custom_call.1} parent=1 // pred_fallthru
      _
    %v21 = vld [vmem:[#allocation2] sm:$0xff]
    %22 = vst [vmem:[#allocation5] sm:$0xff] %v21
    // Predicated region
    $region10: #{tpu_custom_call.1} parent=1 // pred_check
      _
    $region11: #{tpu_custom_call.1} parent=1 // pred_check_branch
      %24 = sbr.rel (0) target = $region13
    $region12: #{tpu_custom_call.1} parent=1 // pred_region
      %s26 = ssub.s32 128, 128
      %27 = vsyncadd [#allocation4], %s26
      %s29 = sshll.u32 [#allocation5], 4
      %s30 = int_to_ptr.vmem [resolvable:$true] %s29
      %32 = dma.vmem_to_hbm [thread:$0]  %s30, 128, %s1, [#allocation4]
    $region13: #{tpu_custom_call.1} parent=1 // pred_fallthru
      _
    // Predicated region
    $region14: #{tpu_custom_call.1} parent=1 // pred_check
      _
    $region15: #{tpu_custom_call.1} parent=1 // pred_check_branch
      %34 = sbr.rel (0) target = $region17
    $region16: #{tpu_custom_call.1} parent=1 // pred_region
      %35 = dma.done [#allocation4], 128
    $region17: #{tpu_custom_call.1} parent=1 // pred_fallthru
      _
    %36 = vsyncpa [#allocation3], 1
    %37 = vsyncpa [#allocation4], 1

</llo_original>
